<compile_context>
chip_gen: v5e
topology: v5e:2x2
jax: 0.10.0
libtpu: 0.0.40
codegen_flags: <defaults>
</compile_context>

<pallas_src>
import jax
import jax.numpy as jnp
from jax.experimental import pallas as pl
from jax.experimental.pallas import tpu as pltpu


def _round_up(n, m):
    return ((n + m - 1) // m) * m


def tcn_fusion(x, w1, b1, w2, b2, gamma, beta, *, t_tile=512):
    """TCNFusion forward.

    x:  (B, T, Cin)
    w1: (3, Cin, Cmid)   (PyTorch Conv1d weight (out,in,k) -> permute(2,1,0))
    w2: (3, Cmid, H)
    b1: (Cmid,)  b2/gamma/beta: (H,)
    returns (B, T, H) in x.dtype
    """
    B, T, Cin = x.shape
    assert w1.shape[0] == 3 and w1.shape[1] == Cin
    Cmid = w1.shape[2]
    assert w2.shape[0] == 3 and w2.shape[1] == Cmid
    H = w2.shape[2]

    LANE = 128
    Cin_p = _round_up(Cin, LANE)
    Cmid_p = _round_up(Cmid, LANE)
    H_p = _round_up(H, LANE)

    # ---- time tiling (sublane aligned) ----
    T_TILE = min(_round_up(t_tile, 8), _round_up(T, 8))
    T_pad = _round_up(T, T_TILE)
    num_t = T_pad // T_TILE
    M = T_TILE + 8     # halo'd raw-x rows fetched per tile (multiple of 8)
    M2 = T_TILE + 2    # h1 rows needed per tile (times t0-1 .. t0+T_TILE)

    cdt = x.dtype      # MXU operand dtype (bf16 in the demo)
    f32 = jnp.float32

    # ---- lane-dense, zero-padded operands (layout plumbing, done once) ----
    # x_p row r holds x[t = r-2]  (zeros outside [0, T))
    x_p = jnp.zeros((B, T_pad + 8, Cin_p), cdt)
    x_p = x_p.at[:, 2:2 + T, :Cin].set(x.astype(cdt))

    w1u = (jnp.zeros((3, Cin_p, Cmid_p), cdt)
           .at[:, :Cin, :Cmid].set(w1.astype(cdt))
           .reshape(3 * Cin_p, Cmid_p))
    w2u = (jnp.zeros((3, Cmid_p, H_p), cdt)
           .at[:, :Cmid, :H].set(w2.astype(cdt))
           .reshape(3 * Cmid_p, H_p))
    b1p = jnp.zeros((1, Cmid_p), f32).at[:, :Cmid].set(b1.reshape(1, -1).astype(f32))
    b2p = jnp.zeros((1, H_p), f32).at[:, :H].set(b2.reshape(1, -1).astype(f32))
    gp = jnp.zeros((1, H_p), f32).at[:, :H].set(gamma.reshape(1, -1).astype(f32))
    bp = jnp.zeros((1, H_p), f32).at[:, :H].set(beta.reshape(1, -1).astype(f32))

    def kernel(x_hbm, w1u_ref, b1_ref, w2u_ref, b2_ref, g_ref, beta_ref,
               o_ref, xbuf, dma_sem):
        bidx = pl.program_id(0)
        ti = pl.program_id(1)
        num_ti = pl.num_programs(1)
        start = pl.multiple_of(ti * T_TILE, 8)
        slot = ti % 2

        def fetch(row0, dst_slot):
            pltpu.make_async_copy(
                x_hbm.at[bidx, pl.ds(row0, M), :],
                xbuf.at[dst_slot], dma_sem.at[dst_slot]).start()

        # Prime the pipeline at the first time tile of each batch element.
        @pl.when(ti == 0)
        def _():
            fetch(start, slot)

        # Wait for the current tile's halo'd window (started here at ti==0,
        # otherwise by the previous iteration's prefetch).
        pltpu.make_async_copy(
            x_hbm.at[bidx, pl.ds(start, M), :],
            xbuf.at[slot], dma_sem.at[slot]).wait()

        # Prefetch the next time tile (same batch) into the other slot; the
        # DMA overlaps with the two matmuls below.
        @pl.when(ti + 1 < num_ti)
        def _():
            fetch(pl.multiple_of((ti + 1) * T_TILE, 8), 1 - slot)

        # ---- Conv1d #1: 3 taps fused into ONE MXU matmul ----
        # xbuf local row j corresponds to global time t = start - 2 + j, so
        # xc row j = [x[t0-2+j] | x[t0-1+j] | x[t0+j]] = taps of h1 at time
        # s = start - 1 + j.
        xs = xbuf.at[slot]
        xc = jnp.concatenate(
            [xs[pl.ds(0, M2), :], xs[pl.ds(1, M2), :], xs[pl.ds(2, M2), :]],
            axis=-1)                                        # (M2, 3*Cin_p) cdt
        h1 = jnp.dot(xc, w1u_ref[...],
                     preferred_element_type=jnp.float32)    # (M2, Cmid_p) f32
        h1 = jnp.maximum(h1 + b1_ref[...], 0.0)             # bias + ReLU

        # Conv2's zero padding acts on h1, so rows at t<0 or t>=T must be
        # exactly zero.  Cheap (M2, 1) column mask broadcast over lanes.
        t_col = (start - 1) + jax.lax.broadcasted_iota(jnp.int32, (M2, 1), 0)
        h1 = jnp.where((t_col >= 0) & (t_col < T), h1, 0.0)
        h1 = h1.astype(cdt)                                  # cast before concat

        # ---- Conv1d #2: 3 shifted h1 views along lanes, one MXU matmul ----
        h1c = jnp.concatenate(
            [h1[0:T_TILE], h1[1:T_TILE + 1], h1[2:T_TILE + 2]],
            axis=-1)                                         # (T_TILE, 3*Cmid_p)
        h2 = jnp.dot(h1c, w2u_ref[...],
                     preferred_element_type=jnp.float32) + b2_ref[...]

        # ---- one-pass LayerNorm over the real H channels ----
        # (padded lanes of h2/b2/gamma/beta are exactly zero -> lane sums ok)
        inv_h = 1.0 / H
        ssum = jnp.sum(h2, axis=-1, keepdims=True)
        ssq = jnp.sum(h2 * h2, axis=-1, keepdims=True)
        mean = ssum * inv_h
        var = jnp.maximum(ssq * inv_h - mean * mean, 0.0)
        out = (h2 - mean) * jax.lax.rsqrt(var + 1e-5)
        out = out * g_ref[...] + beta_ref[...]
        o_ref[0] = out.astype(o_ref.dtype)                   # dense (T_TILE, H_p)

    out = pl.pallas_call(
        kernel,
        out_shape=jax.ShapeDtypeStruct((B, T_pad, H_p), x.dtype),
        grid_spec=pltpu.PrefetchScalarGridSpec(
            num_scalar_prefetch=0,
            grid=(B, num_t),
            in_specs=[
                pl.BlockSpec(memory_space=pl.ANY),                    # raw x (HBM)
                pl.BlockSpec((3 * Cin_p, Cmid_p), lambda b, t: (0, 0)),
                pl.BlockSpec((1, Cmid_p), lambda b, t: (0, 0)),
                pl.BlockSpec((3 * Cmid_p, H_p), lambda b, t: (0, 0)),
                pl.BlockSpec((1, H_p), lambda b, t: (0, 0)),
                pl.BlockSpec((1, H_p), lambda b, t: (0, 0)),
                pl.BlockSpec((1, H_p), lambda b, t: (0, 0)),
            ],
            out_specs=pl.BlockSpec((1, T_TILE, H_p), lambda b, t: (b, t, 0)),
            scratch_shapes=[
                pltpu.VMEM((2, M, Cin_p), cdt),      # double-buffered halo window
                pltpu.SemaphoreType.DMA((2,)),
            ],
        ),
        compiler_params=pltpu.CompilerParams(
            # batch axis may shard across TCs; time axis carries the
            # double-buffer state -> keep it sequential on one core.
            dimension_semantics=("parallel", "arbitrary"),
            vmem_limit_bytes=32 * 1024 * 1024,
        ),
    )(x_p, w1u, b1p, w2u, b2p, gp, bp)

    if T_pad == T and H_p == H:
        return out                                   # already dense, no copy
    return out[:, :T, :H]                            # un-pad T and H


def tcn_fusion_ref(x, w1, b1, w2, b2, gamma, beta):
    """Pure-JAX f32 reference with identical semantics (Conv1d k=3 pad=1 x2 + LN)."""
    f32 = jnp.float32
    x = x.astype(f32)
    w1 = w1.astype(f32)
    w2 = w2.astype(f32)
    b1 = b1.astype(f32).reshape(1, 1, -1)
    b2 = b2.astype(f32).reshape(1, 1, -1)
    gamma = gamma.astype(f32).reshape(1, 1, -1)
    beta = beta.astype(f32).reshape(1, 1, -1)

    def conv1d_same(h, w, b):                 # h: (B,T,Ci), w: (3,Ci,Co)
        zp = jnp.zeros((h.shape[0], 1, h.shape[2]), h.dtype)
        hp = jnp.concatenate([zp, h[:, :-1]], axis=1)
        hn = jnp.concatenate([h[:, 1:], zp], axis=1)
        return (jnp.einsum("bti,io->bto", hp, w[0])
                + jnp.einsum("bti,io->bto", h, w[1])
                + jnp.einsum("bti,io->bto", hn, w[2]) + b)

    h1 = jax.nn.relu(conv1d_same(x, w1, b1))
    h2 = conv1d_same(h1, w2, b2)
    mean = jnp.mean(h2, axis=-1, keepdims=True)
    var = jnp.mean((h2 - mean) ** 2, axis=-1, keepdims=True)
    return (h2 - mean) * jax.lax.rsqrt(var + 1e-5) * gamma + beta


def _make_params(key, input_dim, hidden_dim, dt):
    cmid = hidden_dim // 2
    k1, k2, k3, k4 = jax.random.split(key, 4)
    # Conv1d weights in the PyTorch layout (out, in, k) -> kernel layout
    # (k, in, out) via the documented permute(2, 1, 0).
    w1_torch = 0.1 * jax.random.normal(k1, (cmid, input_dim, 3), jnp.float32)
    w2_torch = 0.1 * jax.random.normal(k3, (hidden_dim, cmid, 3), jnp.float32)
    w1 = jnp.transpose(w1_torch, (2, 1, 0)).astype(dt)    # (3, Cin, Cmid)
    w2 = jnp.transpose(w2_torch, (2, 1, 0)).astype(dt)    # (3, Cmid, H)
    b1 = 0.1 * jax.random.normal(k2, (cmid,), jnp.float32)
    b2 = 0.1 * jax.random.normal(k4, (hidden_dim,), jnp.float32)
    gamma = jnp.ones((hidden_dim,), jnp.float32)
    beta = jnp.zeros((hidden_dim,), jnp.float32)
    return w1, b1, w2, b2, gamma, beta


if __name__ == "__main__":
    input_dim, hidden_dim = 8, 32
    key = jax.random.PRNGKey(0)
    kx1, kx2, kp = jax.random.split(key, 3)
    w1, b1, w2, b2, gamma, beta = _make_params(kp, input_dim, hidden_dim, jnp.float32)

    # ---- Test 1: bf16 MXU path, single time tile ----
    B, T = 2, 16
    dt = jnp.bfloat16
    x = jax.random.normal(kx1, (B, T, input_dim), jnp.float32).astype(dt)
    out = tcn_fusion(x, w1.astype(dt), b1, w2.astype(dt), b2, gamma, beta)
    out = jax.block_until_ready(out)
    ref = tcn_fusion_ref(x, w1, b1, w2, b2, gamma, beta)
    assert out.shape == (B, T, hidden_dim)
    out32 = out.astype(jnp.float32)
    err1 = float(jnp.max(jnp.abs(out32 - ref)))
    assert jnp.allclose(out32, ref, atol=4e-2, rtol=4e-2), (
        f"bf16 mismatch vs reference (max abs err {err1})")

    # ---- Test 2: f32 path, multiple time tiles (exercises double-buffered
    #      halo DMA, prefetch, and tail padding / boundary masks) ----
    B2, T2 = 2, 40
    x2 = jax.random.normal(kx2, (B2, T2, input_dim), jnp.float32)
    out2 = tcn_fusion(x2, w1, b1, w2, b2, gamma, beta, t_tile=16)
    out2 = jax.block_until_ready(out2)
    ref2 = tcn_fusion_ref(x2, w1, b1, w2, b2, gamma, beta)
    assert out2.shape == (B2, T2, hidden_dim)
    err2 = float(jnp.max(jnp.abs(out2 - ref2)))
    assert jnp.allclose(out2, ref2, atol=1e-3, rtol=1e-3), (
        f"f32 multi-tile mismatch vs reference (max abs err {err2})")

    print("KERNEL_OK")
</pallas_src>

<mosaic_0001>
module attributes {stable_mosaic.version = 11 : i64} {
  func.func @kernel(%arg0: i32, %arg1: i32, %arg2: memref<2x24x128xbf16, #tpu.memory_space<any>>, %arg3: memref<384x128xbf16, #tpu.memory_space<vmem>>, %arg4: memref<1x128xf32, #tpu.memory_space<vmem>>, %arg5: memref<384x128xbf16, #tpu.memory_space<vmem>>, %arg6: memref<1x128xf32, #tpu.memory_space<vmem>>, %arg7: memref<1x128xf32, #tpu.memory_space<vmem>>, %arg8: memref<1x128xf32, #tpu.memory_space<vmem>>, %arg9: memref<1x16x128xbf16, #tpu.memory_space<vmem>>, %arg10: memref<2x24x128xbf16, #tpu.memory_space<vmem>>, %arg11: memref<2x!tpu.dma_semaphore, #tpu.memory_space<semaphore_mem>>) attributes {dimension_semantics = [#tpu.dimension_semantics<parallel>, #tpu.dimension_semantics<arbitrary>], iteration_bounds = array<i64: 2, 1>, scalar_prefetch = 0 : i64, scratch_operands = 2 : i64, tpu.core_type = #tpu.core_type<tc>, window_params = [{}, {pipeline_mode = #tpu.pipeline_mode<synchronous>, transform_indices = @transform_1, window_bounds = array<i64: 384, 128>}, {pipeline_mode = #tpu.pipeline_mode<synchronous>, transform_indices = @transform_2, window_bounds = array<i64: 1, 128>}, {pipeline_mode = #tpu.pipeline_mode<synchronous>, transform_indices = @transform_3, window_bounds = array<i64: 384, 128>}, {pipeline_mode = #tpu.pipeline_mode<synchronous>, transform_indices = @transform_4, window_bounds = array<i64: 1, 128>}, {pipeline_mode = #tpu.pipeline_mode<synchronous>, transform_indices = @transform_5, window_bounds = array<i64: 1, 128>}, {pipeline_mode = #tpu.pipeline_mode<synchronous>, transform_indices = @transform_6, window_bounds = array<i64: 1, 128>}, {transform_indices = @transform_7, window_bounds = array<i64: 1, 16, 128>}]} {
    %c16_i32 = arith.constant 16 : i32
    %0 = arith.muli %arg1, %c16_i32 : i32
    %1 = tpu.assume_multiple %0, 8 : i32
    %c2_i32 = arith.constant 2 : i32
    %c0_i32 = arith.constant 0 : i32
    %2 = arith.cmpi eq, %c2_i32, %c0_i32 : i32
    %c1_i32 = arith.constant 1 : i32
    %3 = arith.select %2, %c1_i32, %c2_i32 : i32
    %4 = arith.remsi %arg1, %3 : i32
    %c0_i32_0 = arith.constant 0 : i32
    %5 = arith.cmpi ne, %4, %c0_i32_0 : i32
    %c0_i32_1 = arith.constant 0 : i32
    %6 = arith.cmpi slt, %4, %c0_i32_1 : i32
    %c0_i32_2 = arith.constant 0 : i32
    %7 = arith.cmpi slt, %3, %c0_i32_2 : i32
    %8 = arith.xori %6, %7 : i1
    %9 = arith.andi %8, %5 : i1
    %10 = arith.addi %4, %3 : i32
    %11 = arith.select %9, %10, %4 : i32
    %c0_i32_3 = arith.constant 0 : i32
    %12 = arith.cmpi eq, %arg1, %c0_i32_3 : i32
    %13 = arith.extui %12 : i1 to i32
    %c0_i32_4 = arith.constant 0 : i32
    %14 = arith.cmpi ne, %13, %c0_i32_4 : i32
    scf.if %14 {
      %c0_i32_47 = arith.constant 0 : i32
      %95 = tpu.memref_slice %arg2[%arg0, %1, %c0_i32_47] : memref<2x24x128xbf16, #tpu.memory_space<any>> -> memref<1x24x128xbf16, #tpu.memory_space<any>>
      %96 = tpu.memref_squeeze %95 : memref<1x24x128xbf16, #tpu.memory_space<any>> -> memref<24x128xbf16, #tpu.memory_space<any>>
      %c0_i32_48 = arith.constant 0 : i32
      %c0_i32_49 = arith.constant 0 : i32
      %97 = tpu.memref_slice %arg10[%11, %c0_i32_48, %c0_i32_49] : memref<2x24x128xbf16, #tpu.memory_space<vmem>> -> memref<1x24x128xbf16, #tpu.memory_space<vmem>>
      %98 = tpu.memref_squeeze %97 : memref<1x24x128xbf16, #tpu.memory_space<vmem>> -> memref<24x128xbf16, #tpu.memory_space<vmem>>
      %99 = tpu.memref_slice %arg11[%11] : memref<2x!tpu.dma_semaphore, #tpu.memory_space<semaphore_mem>> -> memref<1x!tpu.dma_semaphore, #tpu.memory_space<semaphore_mem>>
      %100 = tpu.memref_squeeze %99 : memref<1x!tpu.dma_semaphore, #tpu.memory_space<semaphore_mem>> -> memref<!tpu.dma_semaphore, #tpu.memory_space<semaphore_mem>>
      tpu.enqueue_dma source(%96 : memref<24x128xbf16, #tpu.memory_space<any>>) target(%98 : memref<24x128xbf16, #tpu.memory_space<vmem>>) target_semaphore(%100 : memref<!tpu.dma_semaphore, #tpu.memory_space<semaphore_mem>>)
    } else {
    }
    %c0_i32_5 = arith.constant 0 : i32
    %15 = tpu.memref_slice %arg2[%arg0, %1, %c0_i32_5] : memref<2x24x128xbf16, #tpu.memory_space<any>> -> memref<1x24x128xbf16, #tpu.memory_space<any>>
    %16 = tpu.memref_squeeze %15 : memref<1x24x128xbf16, #tpu.memory_space<any>> -> memref<24x128xbf16, #tpu.memory_space<any>>
    %c0_i32_6 = arith.constant 0 : i32
    %c0_i32_7 = arith.constant 0 : i32
    %17 = tpu.memref_slice %arg10[%11, %c0_i32_6, %c0_i32_7] : memref<2x24x128xbf16, #tpu.memory_space<vmem>> -> memref<1x24x128xbf16, #tpu.memory_space<vmem>>
    %18 = tpu.memref_squeeze %17 : memref<1x24x128xbf16, #tpu.memory_space<vmem>> -> memref<24x128xbf16, #tpu.memory_space<vmem>>
    %19 = tpu.memref_slice %arg11[%11] : memref<2x!tpu.dma_semaphore, #tpu.memory_space<semaphore_mem>> -> memref<1x!tpu.dma_semaphore, #tpu.memory_space<semaphore_mem>>
    %20 = tpu.memref_squeeze %19 : memref<1x!tpu.dma_semaphore, #tpu.memory_space<semaphore_mem>> -> memref<!tpu.dma_semaphore, #tpu.memory_space<semaphore_mem>>
    tpu.wait_dma2 semaphore(%20 : memref<!tpu.dma_semaphore, #tpu.memory_space<semaphore_mem>>) src(%16 : memref<24x128xbf16, #tpu.memory_space<any>>) dst(%18 : memref<24x128xbf16, #tpu.memory_space<vmem>>)
    %c1_i32_8 = arith.constant 1 : i32
    %21 = arith.addi %arg1, %c1_i32_8 : i32
    %c1_i32_9 = arith.constant 1 : i32
    %22 = arith.cmpi slt, %21, %c1_i32_9 : i32
    %23 = arith.extui %22 : i1 to i32
    %c0_i32_10 = arith.constant 0 : i32
    %24 = arith.cmpi ne, %23, %c0_i32_10 : i32
    scf.if %24 {
      %c1_i32_47 = arith.constant 1 : i32
      %95 = arith.addi %arg1, %c1_i32_47 : i32
      %c16_i32_48 = arith.constant 16 : i32
      %96 = arith.muli %95, %c16_i32_48 : i32
      %97 = tpu.assume_multiple %96, 8 : i32
      %c1_i32_49 = arith.constant 1 : i32
      %98 = arith.subi %c1_i32_49, %11 : i32
      %c0_i32_50 = arith.constant 0 : i32
      %99 = tpu.memref_slice %arg2[%arg0, %97, %c0_i32_50] : memref<2x24x128xbf16, #tpu.memory_space<any>> -> memref<1x24x128xbf16, #tpu.memory_space<any>>
      %100 = tpu.memref_squeeze %99 : memref<1x24x128xbf16, #tpu.memory_space<any>> -> memref<24x128xbf16, #tpu.memory_space<any>>
      %c0_i32_51 = arith.constant 0 : i32
      %c0_i32_52 = arith.constant 0 : i32
      %101 = tpu.memref_slice %arg10[%98, %c0_i32_51, %c0_i32_52] : memref<2x24x128xbf16, #tpu.memory_space<vmem>> -> memref<1x24x128xbf16, #tpu.memory_space<vmem>>
      %102 = tpu.memref_squeeze %101 : memref<1x24x128xbf16, #tpu.memory_space<vmem>> -> memref<24x128xbf16, #tpu.memory_space<vmem>>
      %103 = tpu.memref_slice %arg11[%98] : memref<2x!tpu.dma_semaphore, #tpu.memory_space<semaphore_mem>> -> memref<1x!tpu.dma_semaphore, #tpu.memory_space<semaphore_mem>>
      %104 = tpu.memref_squeeze %103 : memref<1x!tpu.dma_semaphore, #tpu.memory_space<semaphore_mem>> -> memref<!tpu.dma_semaphore, #tpu.memory_space<semaphore_mem>>
      tpu.enqueue_dma source(%100 : memref<24x128xbf16, #tpu.memory_space<any>>) target(%102 : memref<24x128xbf16, #tpu.memory_space<vmem>>) target_semaphore(%104 : memref<!tpu.dma_semaphore, #tpu.memory_space<semaphore_mem>>)
    } else {
    }
    %c0_i32_11 = arith.constant 0 : i32
    %c0_i32_12 = arith.constant 0 : i32
    %25 = tpu.memref_slice %arg10[%11, %c0_i32_11, %c0_i32_12] : memref<2x24x128xbf16, #tpu.memory_space<vmem>> -> memref<1x24x128xbf16, #tpu.memory_space<vmem>>
    %26 = tpu.memref_squeeze %25 : memref<1x24x128xbf16, #tpu.memory_space<vmem>> -> memref<24x128xbf16, #tpu.memory_space<vmem>>
    %c0 = arith.constant 0 : index
    %c0_13 = arith.constant 0 : index
    %27 = vector.load %26[%c0, %c0_13] : memref<24x128xbf16, #tpu.memory_space<vmem>>, vector<18x128xbf16>
    %c0_i32_14 = arith.constant 0 : i32
    %c0_i32_15 = arith.constant 0 : i32
    %28 = tpu.memref_slice %arg10[%11, %c0_i32_14, %c0_i32_15] : memref<2x24x128xbf16, #tpu.memory_space<vmem>> -> memref<1x24x128xbf16, #tpu.memory_space<vmem>>
    %29 = tpu.memref_squeeze %28 : memref<1x24x128xbf16, #tpu.memory_space<vmem>> -> memref<24x128xbf16, #tpu.memory_space<vmem>>
    %c1 = arith.constant 1 : index
    %c0_16 = arith.constant 0 : index
    %30 = vector.load %29[%c1, %c0_16] : memref<24x128xbf16, #tpu.memory_space<vmem>>, vector<18x128xbf16>
    %c0_i32_17 = arith.constant 0 : i32
    %c0_i32_18 = arith.constant 0 : i32
    %31 = tpu.memref_slice %arg10[%11, %c0_i32_17, %c0_i32_18] : memref<2x24x128xbf16, #tpu.memory_space<vmem>> -> memref<1x24x128xbf16, #tpu.memory_space<vmem>>
    %32 = tpu.memref_squeeze %31 : memref<1x24x128xbf16, #tpu.memory_space<vmem>> -> memref<24x128xbf16, #tpu.memory_space<vmem>>
    %c2 = arith.constant 2 : index
    %c0_19 = arith.constant 0 : index
    %33 = vector.load %32[%c2, %c0_19] : memref<24x128xbf16, #tpu.memory_space<vmem>>, vector<18x128xbf16>
    %34 = tpu.concatenate %27, %30, %33 in 1 : vector<18x128xbf16>, vector<18x128xbf16>, vector<18x128xbf16> -> vector<18x384xbf16>
    %c0_20 = arith.constant 0 : index
    %c0_21 = arith.constant 0 : index
    %35 = vector.load %arg3[%c0_20, %c0_21] : memref<384x128xbf16, #tpu.memory_space<vmem>>, vector<384x128xbf16>
    %cst = arith.constant dense<0.000000e+00> : vector<18x128xf32>
    %36 = tpu.matmul %34, %35, %cst {dimension_numbers = #tpu.dot_dimension_numbers<[1], [0], [0], [1], [0, 0, 1, 1], [], []>} : vector<18x384xbf16>, vector<384x128xbf16>, vector<18x128xf32> -> vector<18x128xf32>
    %c0_22 = arith.constant 0 : index
    %c0_23 = arith.constant 0 : index
    %37 = vector.load %arg4[%c0_22, %c0_23] : memref<1x128xf32, #tpu.memory_space<vmem>>, vector<1x128xf32>
    %38 = vector.broadcast %37 : vector<1x128xf32> to vector<18x128xf32>
    %39 = arith.addf %36, %38 : vector<18x128xf32>
    %cst_24 = arith.constant 0.000000e+00 : f32
    %40 = vector.broadcast %cst_24 : f32 to vector<18x128xf32>
    %41 = arith.maximumf %39, %40 : vector<18x128xf32>
    %c1_i32_25 = arith.constant 1 : i32
    %42 = arith.subi %1, %c1_i32_25 : i32
    %43 = tpu.iota {dimensions = array<i32: 0>} : vector<18x1xi32>
    %44 = vector.broadcast %42 : i32 to vector<18x1xi32>
    %45 = arith.addi %44, %43 : vector<18x1xi32>
    %c0_i32_26 = arith.constant 0 : i32
    %46 = vector.broadcast %c0_i32_26 : i32 to vector<18x1xi32>
    %47 = arith.cmpi sge, %45, %46 : vector<18x1xi32>
    %c16_i32_27 = arith.constant 16 : i32
    %48 = vector.broadcast %c16_i32_27 : i32 to vector<18x1xi32>
    %49 = arith.cmpi slt, %45, %48 : vector<18x1xi32>
    %50 = arith.andi %47, %49 : vector<18x1xi1>
    %cst_28 = arith.constant 0.000000e+00 : f32
    %51 = vector.shape_cast %50 : vector<18x1xi1> to vector<18x1xi1>
    %52 = vector.broadcast %51 : vector<18x1xi1> to vector<18x128xi1>
    %53 = vector.broadcast %cst_28 : f32 to vector<18x128xf32>
    %54 = arith.select %52, %41, %53 : vector<18x128xi1>, vector<18x128xf32>
    %55 = arith.truncf %54 : vector<18x128xf32> to vector<18x128xbf16>
    %56 = vector.extract_strided_slice %55 {offsets = [0, 0], sizes = [16, 128], strides = [1, 1]} : vector<18x128xbf16> to vector<16x128xbf16>
    %57 = vector.extract_strided_slice %55 {offsets = [1, 0], sizes = [16, 128], strides = [1, 1]} : vector<18x128xbf16> to vector<16x128xbf16>
    %58 = vector.extract_strided_slice %55 {offsets = [2, 0], sizes = [16, 128], strides = [1, 1]} : vector<18x128xbf16> to vector<16x128xbf16>
    %59 = tpu.concatenate %56, %57, %58 in 1 : vector<16x128xbf16>, vector<16x128xbf16>, vector<16x128xbf16> -> vector<16x384xbf16>
    %c0_29 = arith.constant 0 : index
    %c0_30 = arith.constant 0 : index
    %60 = vector.load %arg5[%c0_29, %c0_30] : memref<384x128xbf16, #tpu.memory_space<vmem>>, vector<384x128xbf16>
    %cst_31 = arith.constant dense<0.000000e+00> : vector<16x128xf32>
    %61 = tpu.matmul %59, %60, %cst_31 {dimension_numbers = #tpu.dot_dimension_numbers<[1], [0], [0], [1], [0, 0, 1, 1], [], []>} : vector<16x384xbf16>, vector<384x128xbf16>, vector<16x128xf32> -> vector<16x128xf32>
    %c0_32 = arith.constant 0 : index
    %c0_33 = arith.constant 0 : index
    %62 = vector.load %arg6[%c0_32, %c0_33] : memref<1x128xf32, #tpu.memory_space<vmem>>, vector<1x128xf32>
    %63 = vector.broadcast %62 : vector<1x128xf32> to vector<16x128xf32>
    %64 = arith.addf %61, %63 : vector<16x128xf32>
    %cst_34 = arith.constant dense<0.000000e+00> : vector<16xf32>
    %65 = vector.multi_reduction <add>, %64, %cst_34 [1] : vector<16x128xf32> to vector<16xf32>
    %66 = vector.shape_cast %65 : vector<16xf32> to vector<16x1xf32>
    %67 = arith.mulf %64, %64 : vector<16x128xf32>
    %cst_35 = arith.constant dense<0.000000e+00> : vector<16xf32>
    %68 = vector.multi_reduction <add>, %67, %cst_35 [1] : vector<16x128xf32> to vector<16xf32>
    %69 = vector.shape_cast %68 : vector<16xf32> to vector<16x1xf32>
    %cst_36 = arith.constant 3.125000e-02 : f32
    %70 = vector.broadcast %cst_36 : f32 to vector<16x1xf32>
    %71 = arith.mulf %66, %70 : vector<16x1xf32>
    %cst_37 = arith.constant 3.125000e-02 : f32
    %72 = vector.broadcast %cst_37 : f32 to vector<16x1xf32>
    %73 = arith.mulf %69, %72 : vector<16x1xf32>
    %74 = arith.mulf %71, %71 : vector<16x1xf32>
    %75 = arith.subf %73, %74 : vector<16x1xf32>
    %cst_38 = arith.constant 0.000000e+00 : f32
    %76 = vector.broadcast %cst_38 : f32 to vector<16x1xf32>
    %77 = arith.maximumf %75, %76 : vector<16x1xf32>
    %78 = vector.broadcast %71 : vector<16x1xf32> to vector<16x128xf32>
    %79 = arith.subf %64, %78 : vector<16x128xf32>
    %cst_39 = arith.constant 9.99999974E-6 : f32
    %80 = vector.broadcast %cst_39 : f32 to vector<16x1xf32>
    %81 = arith.addf %77, %80 : vector<16x1xf32>
    %82 = math.rsqrt %81 : vector<16x1xf32>
    %83 = vector.broadcast %82 : vector<16x1xf32> to vector<16x128xf32>
    %84 = arith.mulf %79, %83 : vector<16x128xf32>
    %c0_40 = arith.constant 0 : index
    %c0_41 = arith.constant 0 : index
    %85 = vector.load %arg7[%c0_40, %c0_41] : memref<1x128xf32, #tpu.memory_space<vmem>>, vector<1x128xf32>
    %86 = vector.broadcast %85 : vector<1x128xf32> to vector<16x128xf32>
    %87 = arith.mulf %84, %86 : vector<16x128xf32>
    %c0_42 = arith.constant 0 : index
    %c0_43 = arith.constant 0 : index
    %88 = vector.load %arg8[%c0_42, %c0_43] : memref<1x128xf32, #tpu.memory_space<vmem>>, vector<1x128xf32>
    %89 = vector.broadcast %88 : vector<1x128xf32> to vector<16x128xf32>
    %90 = arith.addf %87, %89 : vector<16x128xf32>
    %91 = arith.truncf %90 : vector<16x128xf32> to vector<16x128xbf16>
    %c0_44 = arith.constant 0 : index
    %c0_45 = arith.constant 0 : index
    %c0_46 = arith.constant 0 : index
    %92 = vector.load %arg9[%c0_44, %c0_45, %c0_46] : memref<1x16x128xbf16, #tpu.memory_space<vmem>>, vector<1x16x128xbf16>
    %93 = vector.shape_cast %92 : vector<1x16x128xbf16> to vector<16x128xbf16>
    %94 = vector.shape_cast %91 : vector<16x128xbf16> to vector<1x16x128xbf16>
    tpu.vector_store %arg9[%c0_44, %c0_45, %c0_46], %94 {strides = array<i32>} : memref<1x16x128xbf16, #tpu.memory_space<vmem>>, vector<1x16x128xbf16>,
    return
  }
  func.func @transform_1(%arg0: i32, %arg1: i32) -> (i32, i32) {
    %c0_i32 = arith.constant 0 : i32
    %c0_i32_0 = arith.constant 0 : i32
    %c0_i32_1 = arith.constant 0 : i32
    return %c0_i32, %c0_i32_0 : i32, i32
  }
  func.func @transform_2(%arg0: i32, %arg1: i32) -> (i32, i32) {
    %c0_i32 = arith.constant 0 : i32
    %c0_i32_0 = arith.constant 0 : i32
    %c0_i32_1 = arith.constant 0 : i32
    return %c0_i32, %c0_i32_0 : i32, i32
  }
  func.func @transform_3(%arg0: i32, %arg1: i32) -> (i32, i32) {
    %c0_i32 = arith.constant 0 : i32
    %c0_i32_0 = arith.constant 0 : i32
    %c0_i32_1 = arith.constant 0 : i32
    return %c0_i32, %c0_i32_0 : i32, i32
  }
  func.func @transform_4(%arg0: i32, %arg1: i32) -> (i32, i32) {
    %c0_i32 = arith.constant 0 : i32
    %c0_i32_0 = arith.constant 0 : i32
    %c0_i32_1 = arith.constant 0 : i32
    return %c0_i32, %c0_i32_0 : i32, i32
  }
  func.func @transform_5(%arg0: i32, %arg1: i32) -> (i32, i32) {
    %c0_i32 = arith.constant 0 : i32
    %c0_i32_0 = arith.constant 0 : i32
    %c0_i32_1 = arith.constant 0 : i32
    return %c0_i32, %c0_i32_0 : i32, i32
  }
  func.func @transform_6(%arg0: i32, %arg1: i32) -> (i32, i32) {
    %c0_i32 = arith.constant 0 : i32
    %c0_i32_0 = arith.constant 0 : i32
    %c0_i32_1 = arith.constant 0 : i32
    return %c0_i32, %c0_i32_0 : i32, i32
  }
  func.func @transform_7(%arg0: i32, %arg1: i32) -> (i32, i32, i32) {
    %c0_i32 = arith.constant 0 : i32
    %c0_i32_0 = arith.constant 0 : i32
    return %arg0, %arg1, %c0_i32 : i32, i32, i32
  }
}

</mosaic_0001>

<llo_original>
// kernel: tpu_custom_call.1
$region0: #{tpu_custom_call.1}
  #allocation0 [shape = 'u32[]', space=smem, size = 0x4, offset = 0x4, fixed_abs, tag = 'smem constant byte address 0x4 - core index']
  #allocation1 [shape = 'u32[72,128]{1,0:T(1,128)}', space=vmem, size = 0x9000, scoped, tag = 'internal scratch']
  #allocation2 [shape = 'bf16[2,24,128]{2,1,0:T(8,128)(2,1)}', space=vmem, size = 0x3000, scoped, tag = 'scratch operand']
  #allocation3 [shape = 's32[2]{0}', space=sflag, size = 0x8, scoped, tag = 'scratch operand']
  #allocation10 [shape = 's32[]', space=sflag, size = 0x4, offset = 0, fixed_abs, tag = 'sflag constant byte address 0x0 - dummy sync flag']
  #allocation11 [shape = 's32[]', space=sflag, size = 0x4, offset = 0, fixed_abs, tag = 'sflag constant byte address 0x0 - dummy sync flag']
  #allocation12 [shape = 'u32[]', space=smem, size = 0x4, offset = 0x44, fixed_abs, tag = 'smem constant byte address 0x44 - assertion arg 0']
  #allocation13 [shape = 'u32[]', space=smem, size = 0x4, offset = 0x48, fixed_abs, tag = 'smem constant byte address 0x48 - assertion arg 1']
  #allocation14 [shape = 's32[]', space=sflag, size = 0x4, offset = 0, fixed_abs, tag = 'sflag constant byte address 0x0 - dummy sync flag']
  #allocation15 [shape = 's32[]', space=sflag, size = 0x4, offset = 0, fixed_abs, tag = 'sflag constant byte address 0x0 - dummy sync flag']
  %s0 = inlined_call_operand.hbm [shape: bf16[2,24,128], index: 0, kind: input, shape index: {}]
  %s1 = inlined_call_operand.hbm [shape: bf16[384,128], index: 1, kind: input, shape index: {}]
  %s2 = inlined_call_operand.vmem [shape: f32[1,128], index: 2, kind: input, shape index: {}]
  %s3 = inlined_call_operand.hbm [shape: bf16[384,128], index: 3, kind: input, shape index: {}]
  %s4 = inlined_call_operand.vmem [shape: f32[1,128], index: 4, kind: input, shape index: {}]
  %s5 = inlined_call_operand.vmem [shape: f32[1,128], index: 5, kind: input, shape index: {}]
  %s6 = inlined_call_operand.vmem [shape: f32[1,128], index: 6, kind: input, shape index: {}]
  %s7 = inlined_call_operand.hbm [shape: bf16[2,16,128], index: 7, kind: output, shape index: {}]
  %s8 = sld [smem:[#allocation0]]
  $region81: #{tpu_custom_call.1} parent=0
    _
  %s10 = ssub.s32 1, %s8
  %s11 = scalar_select 0, %s10, %s8
  $region1: #{tpu_custom_call.1} parent=0
    #allocation4 [shape = 'u8[98304]{0}', space=vmem, size = 0x18000, scoped, tag = 'input window, operand 1, single buffered']
    #allocation5 [shape = 's32[2]{0}', space=sflag, size = 0x8, scoped, tag = 'scoped memory for tpu_custom_call.1']
    #allocation6 [shape = 's32[2]{0}', space=sflag, size = 0x8, scoped, tag = 'scoped memory for tpu_custom_call.1']
    #allocation7 [shape = 'u8[98304]{0}', space=vmem, size = 0x18000, scoped, tag = 'input window, operand 3, single buffered']
    #allocation8 [shape = 's32[1]{0}', space=sflag, size = 0x4, scoped, tag = 'scoped memory for tpu_custom_call.1']
    #allocation9 [shape = 'u8[8192]{0}', space=vmem, size = 0x2000, scoped, tag = 'output window, operand 0']
    %12 = vsyncpa [#allocation5], 0
    %13 = vsyncpa [#allocation8], 0
    %14 = vsyncpa [#allocation6], 0
    %s15 = scalar_lea.sflag [#allocation6], 1
    %16 = vsyncpa %s15, 0
    loop: start=0, step=1, limit=4
    $region2: #{tpu_custom_call.1} parent=1 // loop_pre_header
      _
    $region3: #{tpu_custom_call.1} parent=1 // loop_header
      %s18 = sphi 0, %s22
      %p19 = scmp.ge.s32.totalorder %s18, 4
      %s25 = sphi 0, %s37
      %s26 = sphi 0, %s33
      %s27 = sphi 0, %s25
      %s28 = sphi 0, %s26
      %s29 = sphi 0, %s27
      %s30 = sphi 0, %s28
      %s38 = sphi 0, %s38
      %s40 = sphi 0, %s38
      %s41 = sphi 0, %s40
      %s55 = sphi 0, %s41
      %s59 = sphi 0, %s59
      %s61 = sphi 0, %s59
      %s62 = sphi 0, %s61
      %s76 = sphi 0, %s62
      %s80 = sphi 0, %s80
      %s82 = sphi 0, %s80
      %s83 = sphi 0, %s82
      %s97 = sphi 0, %s83
      %s101 = sphi 0, %s101
      %s103 = sphi 0, %s101
      %s104 = sphi 0, %s103
      %s118 = sphi 0, %s104
      %s122 = sphi 0, %s122
      %s124 = sphi 0, %s122
      %s125 = sphi 0, %s124
      %s139 = sphi 0, %s125
      %s143 = sphi 0, %s143
      %s145 = sphi 0, %s143
      %s146 = sphi 0, %s145
      %s160 = sphi 0, %s146
      %s168 = sphi 0, %s170
      %s171 = sphi 0, %s168
      %s172 = sphi 0, %s171
      %s188 = sphi 0, %s172
    $region4: #{tpu_custom_call.1} parent=1 // loop_header_branch
      %21 = sbr.rel (%p19) target = $region8
    $region5: #{tpu_custom_call.1} parent=1 // loop_body
      %s23 = ssub.s32 %s18, 1
      %s24 = ssub.s32 %s18, 2
      %s31 = sadd.s32 1, %s26
      %p32 = scmp.ge.s32.totalorder %s31, 1
      %s33 = scalar_select %p32, 0, %s31
      %s34 = sadd.s32 1, %s25
      %s35 = scalar_select %p32, %s34, %s25
      %p36 = scmp.ge.s32.totalorder %s35, 2
      %s37 = scalar_select %p36, 0, %s35
      %s39 = sadd.s32 %s38, 1
      %p42 = scmp.eq.s32.totalorder %s18, 1
      %p43 = scmp.ne.s32.totalorder %s38, %s40
      %p44 = scmp.eq.s32.totalorder %s18, 0
      %p45 = por %p43, %p44
      %p46 = scmp.ne.s32.totalorder %s38, %s40
      %p47 = scmp.eq.s32.totalorder %s23, 1
      %p48 = por %p46, %p47
      %p49 = scmp.ne.s32.totalorder %s40, %s41
      %p50 = scmp.eq.s32.totalorder %s23, 0
      %p51 = por %p49, %p50
      %p52 = scmp.ne.s32.totalorder %s40, %s41
      %p53 = scmp.eq.s32.totalorder %s24, 1
      %p54 = por %p52, %p53
      %p56 = scmp.ne.s32.totalorder %s41, %s55
      %p57 = scmp.eq.s32.totalorder %s24, 0
      %p58 = por %p56, %p57
      %s60 = sadd.s32 %s59, 1
      %p63 = scmp.eq.s32.totalorder %s18, 1
      %p64 = scmp.ne.s32.totalorder %s59, %s61
      %p65 = scmp.eq.s32.totalorder %s18, 0
      %p66 = por %p64, %p65
      %p67 = scmp.ne.s32.totalorder %s59, %s61
      %p68 = scmp.eq.s32.totalorder %s23, 1
      %p69 = por %p67, %p68
      %p70 = scmp.ne.s32.totalorder %s61, %s62
      %p71 = scmp.eq.s32.totalorder %s23, 0
      %p72 = por %p70, %p71
      %p73 = scmp.ne.s32.totalorder %s61, %s62
      %p74 = scmp.eq.s32.totalorder %s24, 1
      %p75 = por %p73, %p74
      %p77 = scmp.ne.s32.totalorder %s62, %s76
      %p78 = scmp.eq.s32.totalorder %s24, 0
      %p79 = por %p77, %p78
      %s81 = sadd.s32 %s80, 1
      %p84 = scmp.eq.s32.totalorder %s18, 1
      %p85 = scmp.ne.s32.totalorder %s80, %s82
      %p86 = scmp.eq.s32.totalorder %s18, 0
      %p87 = por %p85, %p86
      %p88 = scmp.ne.s32.totalorder %s80, %s82
      %p89 = scmp.eq.s32.totalorder %s23, 1
      %p90 = por %p88, %p89
      %p91 = scmp.ne.s32.totalorder %s82, %s83
      %p92 = scmp.eq.s32.totalorder %s23, 0
      %p93 = por %p91, %p92
      %p94 = scmp.ne.s32.totalorder %s82, %s83
      %p95 = scmp.eq.s32.totalorder %s24, 1
      %p96 = por %p94, %p95
      %p98 = scmp.ne.s32.totalorder %s83, %s97
      %p99 = scmp.eq.s32.totalorder %s24, 0
      %p100 = por %p98, %p99
      %s102 = sadd.s32 %s101, 1
      %p105 = scmp.eq.s32.totalorder %s18, 1
      %p106 = scmp.ne.s32.totalorder %s101, %s103
      %p107 = scmp.eq.s32.totalorder %s18, 0
      %p108 = por %p106, %p107
      %p109 = scmp.ne.s32.totalorder %s101, %s103
      %p110 = scmp.eq.s32.totalorder %s23, 1
      %p111 = por %p109, %p110
      %p112 = scmp.ne.s32.totalorder %s103, %s104
      %p113 = scmp.eq.s32.totalorder %s23, 0
      %p114 = por %p112, %p113
      %p115 = scmp.ne.s32.totalorder %s103, %s104
      %p116 = scmp.eq.s32.totalorder %s24, 1
      %p117 = por %p115, %p116
      %p119 = scmp.ne.s32.totalorder %s104, %s118
      %p120 = scmp.eq.s32.totalorder %s24, 0
      %p121 = por %p119, %p120
      %s123 = sadd.s32 %s122, 1
      %p126 = scmp.eq.s32.totalorder %s18, 1
      %p127 = scmp.ne.s32.totalorder %s122, %s124
      %p128 = scmp.eq.s32.totalorder %s18, 0
      %p129 = por %p127, %p128
      %p130 = scmp.ne.s32.totalorder %s122, %s124
      %p131 = scmp.eq.s32.totalorder %s23, 1
      %p132 = por %p130, %p131
      %p133 = scmp.ne.s32.totalorder %s124, %s125
      %p134 = scmp.eq.s32.totalorder %s23, 0
      %p135 = por %p133, %p134
      %p136 = scmp.ne.s32.totalorder %s124, %s125
      %p137 = scmp.eq.s32.totalorder %s24, 1
      %p138 = por %p136, %p137
      %p140 = scmp.ne.s32.totalorder %s125, %s139
      %p141 = scmp.eq.s32.totalorder %s24, 0
      %p142 = por %p140, %p141
      %s144 = sadd.s32 %s143, 1
      %p147 = scmp.eq.s32.totalorder %s18, 1
      %p148 = scmp.ne.s32.totalorder %s143, %s145
      %p149 = scmp.eq.s32.totalorder %s18, 0
      %p150 = por %p148, %p149
      %p151 = scmp.ne.s32.totalorder %s143, %s145
      %p152 = scmp.eq.s32.totalorder %s23, 1
      %p153 = por %p151, %p152
      %p154 = scmp.ne.s32.totalorder %s145, %s146
      %p155 = scmp.eq.s32.totalorder %s23, 0
      %p156 = por %p154, %p155
      %p157 = scmp.ne.s32.totalorder %s145, %s146
      %p158 = scmp.eq.s32.totalorder %s24, 1
      %p159 = por %p157, %p158
      %p161 = scmp.ne.s32.totalorder %s146, %s160
      %p162 = scmp.eq.s32.totalorder %s24, 0
      %p163 = por %p161, %p162
      %s164 = ssub.s32 %s25, %s37
      %s165 = ssub.s32 %s26, %s33
      %s166 = sor.u32 %s164, %s165
      %p167 = scmp.eq.s32.totalorder %s166, 0
      %s169 = sadd.s32 %s168, 1
      %s170 = scalar_select %p167, %s168, %s169
      %p173 = pneg %p167
      %p174 = scmp.eq.s32.totalorder %s18, 1
      %p175 = por %p173, %p174
      %p176 = scmp.ne.s32.totalorder %s168, %s171
      %p177 = scmp.eq.s32.totalorder %s18, 0
      %p178 = por %p176, %p177
      %p179 = scmp.ne.s32.totalorder %s168, %s171
      %p180 = scmp.eq.s32.totalorder %s23, 1
      %p181 = por %p179, %p180
      %p182 = scmp.ne.s32.totalorder %s171, %s172
      %p183 = scmp.eq.s32.totalorder %s23, 0
      %p184 = por %p182, %p183
      %p185 = scmp.ne.s32.totalorder %s171, %s172
      %p186 = scmp.eq.s32.totalorder %s24, 1
      %p187 = por %p185, %p186
      %p189 = scmp.ne.s32.totalorder %s172, %s188
      %p190 = scmp.eq.s32.totalorder %s24, 0
      %p191 = por %p189, %p190
      %p192 = scmp.le.s32.totalorder 1, %s18
      %p193 = scmp.lt.s32.totalorder %s18, 3
      %p194 = pnand %p192, %p193
      %p195 = pneg %p194
      // Predicated region
      $region9: #{tpu_custom_call.1} parent=5 // pred_check
        _
      $region10: #{tpu_custom_call.1} parent=5 // pred_check_branch
        %197 = sbr.rel (%p194) target = $region12
      $region11: #{tpu_custom_call.1} parent=5 // pred_region
        %s198 = ssub.s32 %s18, 1
        // Predicated region
        $region13: #{tpu_custom_call.1} parent=11 // pred_check
          %p199 = pneg %p51
        $region14: #{tpu_custom_call.1} parent=11 // pred_check_branch
          %201 = sbr.rel (%p199) target = $region16
        $region15: #{tpu_custom_call.1} parent=11 // pred_region
          %203 = vsyncadd [#allocation5], 0
          %s204 = sshll.u32 %s1, 4
          %s205 = int_to_ptr.hbm [resolvable:$true] %s204
          %s206 = sshll.u32 [#allocation4], 4
          %s207 = int_to_ptr.vmem [resolvable:$true] %s206
          %212 = dma.hbm_to_vmem [thread:$0]  %s205, 3072, %s207, [#allocation5], 64, 64, 4
        $region16: #{tpu_custom_call.1} parent=11 // pred_fallthru
          _
        // Predicated region
        $region17: #{tpu_custom_call.1} parent=11 // pred_check
          %p213 = pneg %p72
        $region18: #{tpu_custom_call.1} parent=11 // pred_check_branch
          %215 = sbr.rel (%p213) target = $region20
        $region19: #{tpu_custom_call.1} parent=11 // pred_region
          _
        $region20: #{tpu_custom_call.1} parent=11 // pred_fallthru
          _
        // Predicated region
        $region21: #{tpu_custom_call.1} parent=11 // pred_check
          %p216 = pneg %p93
        $region22: #{tpu_custom_call.1} parent=11 // pred_check_branch
          %218 = sbr.rel (%p216) target = $region24
        $region23: #{tpu_custom_call.1} parent=11 // pred_region
          %220 = vsyncadd [#allocation8], 0
          %s221 = sshll.u32 %s3, 4
          %s222 = int_to_ptr.hbm [resolvable:$true] %s221
          %s223 = sshll.u32 [#allocation7], 4
          %s224 = int_to_ptr.vmem [resolvable:$true] %s223
          %229 = dma.hbm_to_vmem [thread:$0]  %s222, 3072, %s224, [#allocation8], 64, 64, 4
        $region24: #{tpu_custom_call.1} parent=11 // pred_fallthru
          _
        // Predicated region
        $region25: #{tpu_custom_call.1} parent=11 // pred_check
          %p230 = pneg %p114
        $region26: #{tpu_custom_call.1} parent=11 // pred_check_branch
          %232 = sbr.rel (%p230) target = $region28
        $region27: #{tpu_custom_call.1} parent=11 // pred_region
          _
        $region28: #{tpu_custom_call.1} parent=11 // pred_fallthru
          _
        // Predicated region
        $region29: #{tpu_custom_call.1} parent=11 // pred_check
          %p233 = pneg %p135
        $region30: #{tpu_custom_call.1} parent=11 // pred_check_branch
          %235 = sbr.rel (%p233) target = $region32
        $region31: #{tpu_custom_call.1} parent=11 // pred_region
          _
        $region32: #{tpu_custom_call.1} parent=11 // pred_fallthru
          _
        // Predicated region
        $region33: #{tpu_custom_call.1} parent=11 // pred_check
          %p236 = pneg %p156
        $region34: #{tpu_custom_call.1} parent=11 // pred_check_branch
          %238 = sbr.rel (%p236) target = $region36
        $region35: #{tpu_custom_call.1} parent=11 // pred_region
          _
        $region36: #{tpu_custom_call.1} parent=11 // pred_fallthru
          _
      $region12: #{tpu_custom_call.1} parent=5 // pred_fallthru
        _
      %p239 = scmp.lt.s32.totalorder %s18, 2
      // Predicated region
      $region37: #{tpu_custom_call.1} parent=5 // pred_check
        %p240 = pneg %p239
      $region38: #{tpu_custom_call.1} parent=5 // pred_check_branch
        %242 = sbr.rel (%p240) target = $region40
      $region39: #{tpu_custom_call.1} parent=5 // pred_region
        _
      $region40: #{tpu_custom_call.1} parent=5 // pred_fallthru
        _
      %p243 = scmp.le.s32.totalorder 1, %s18
      %p244 = scmp.lt.s32.totalorder %s18, 3
      %p245 = pnand %p243, %p244
      %p246 = pneg %p245
      // Predicated region
      $region41: #{tpu_custom_call.1} parent=5 // pred_check
        _
      $region42: #{tpu_custom_call.1} parent=5 // pred_check_branch
        %248 = sbr.rel (%p245) target = $region44
      $region43: #{tpu_custom_call.1} parent=5 // pred_region
        %s249 = ssub.s32 %s18, 1
        // Predicated region
        $region45: #{tpu_custom_call.1} parent=43 // pred_check
          %p250 = pneg %p51
        $region46: #{tpu_custom_call.1} parent=43 // pred_check_branch
          %252 = sbr.rel (%p250) target = $region48
        $region47: #{tpu_custom_call.1} parent=43 // pred_region
          %254 = dma.done [#allocation5], 3072
        $region48: #{tpu_custom_call.1} parent=43 // pred_fallthru
          _
        // Predicated region
        $region49: #{tpu_custom_call.1} parent=43 // pred_check
          %p255 = pneg %p93
        $region50: #{tpu_custom_call.1} parent=43 // pred_check_branch
          %257 = sbr.rel (%p255) target = $region52
        $region51: #{tpu_custom_call.1} parent=43 // pred_region
          %259 = dma.done [#allocation8], 3072
        $region52: #{tpu_custom_call.1} parent=43 // pred_fallthru
          _
        %p260 = pneg %p51
        %p261 = pneg %p48
        %p262 = pneg %p72
        %p263 = pneg %p69
        %p264 = pneg %p93
        %p265 = pneg %p90
        %p266 = pneg %p114
        %p267 = pneg %p111
        %p268 = pneg %p135
        %p269 = pneg %p132
        %p270 = pneg %p156
        %p271 = pneg %p153
        %p272 = pneg %p184
        %p273 = pneg %p181
        %s274 = sand.u32 %s171, 1
        %s275 = scalar_lea.sflag [#allocation6], %s274
        %s276 = sand.u32 %s171, 1
        %s277 = smul.addr %s276, 8
        %s278 = scalar_lea.vmem [#allocation9], %s277
        %s279 = smul.u32 2, %s28
        %s280 = smul.u32 %s28, 16
        %p281 = scmp.lt.s32.totalorder %s28, 0
        %s282 = ssub.s32 0, %s28
        %s283 = scalar_select %p281, %s282, %s28
        %s284 = sand.u32 %s283, 1
        %s285 = ssub.s32 0, %s284
        %s286 = scalar_select %p281, %s285, %s284
        %p287 = scmp.ne.s32.totalorder %s286, 0
        %p288 = scmp.lt.s32.totalorder %s286, 0
        %p289 = pnand %p288, %p287
        %p290 = pneg %p289
        %s291 = sadd.s32 %s286, 2
        %s292 = scalar_select %p290, %s291, %s286
        %p293 = scmp.eq.s32.totalorder %s28, 0
        // Predicated region
        $region53: #{tpu_custom_call.1} parent=43 // pred_check
          %p294 = pneg %p293
        $region54: #{tpu_custom_call.1} parent=43 // pred_check_branch
          %296 = sbr.rel (%p294) target = $region56
        $region55: #{tpu_custom_call.1} parent=43 // pred_region
          %s297 = sshra.s32 %s280, 3
          %s298 = sand.u32 %s280, 7
          %s299 = smul.u32 %s27, 3
          %s300 = sadd.s32 %s297, %s299
          %s301 = smul.addr %s300, 4
          %s302 = scalar_lea.hbm %s0, %s301
          %s303 = smul.u32 %s292, 3
          %s304 = smul.addr %s303, 4
          %s305 = scalar_lea.vmem [#allocation2], %s304
          %s306 = scalar_lea.sflag [#allocation3], %s292
          // Predicated region
          $region57: #{tpu_custom_call.1} parent=55 // pred_check
            _
          $region58: #{tpu_custom_call.1} parent=55 // pred_check_branch
            %308 = sbr.rel target = $region60
          $region59: #{tpu_custom_call.1} parent=55 // pred_region
            %309 = sst [smem:[#allocation12]] [#allocation11]
            %310 = sst [smem:[#allocation13]] [#allocation10]
          $region60: #{tpu_custom_call.1} parent=55 // pred_fallthru
            _
          %312 = shalt.err (0)
          %s314 = sshll.u32 %s302, 4
          %s315 = int_to_ptr.hbm [resolvable:$true] %s314
          %s316 = sshll.u32 %s305, 4
          %s317 = int_to_ptr.vmem [resolvable:$true] %s316
          %319 = dma.hbm_to_vmem [thread:$0]  %s315, 192, %s317, %s306
        $region56: #{tpu_custom_call.1} parent=43 // pred_fallthru
          _
        %s320 = smul.u32 %s292, 3
        %s321 = smul.addr %s320, 4
        %s322 = scalar_lea.vmem [#allocation2], %s321
        %s323 = scalar_lea.sflag [#allocation3], %s292
        %s324 = smul.u32 4, 3
        %s325 = smul.u32 %s324, 1
        %s326 = sshll.u32 %s325, 4
        %327 = dma.done %s323, %s326
        %s328 = sadd.s32 %s28, 1
        %p329 = scmp.lt.s32.totalorder %s328, 1
        // Predicated region
        $region61: #{tpu_custom_call.1} parent=43 // pred_check
          %p330 = pneg %p329
        $region62: #{tpu_custom_call.1} parent=43 // pred_check_branch
          %332 = sbr.rel (%p330) target = $region64
        $region63: #{tpu_custom_call.1} parent=43 // pred_region
          %s333 = smul.u32 %s328, 16
          %s334 = ssub.s32 1, %s292
          %s335 = sshra.s32 %s333, 3
          %s336 = sand.u32 %s333, 7
          %s337 = smul.u32 %s27, 3
          %s338 = sadd.s32 %s335, %s337
          %s339 = smul.addr %s338, 4
          %s340 = scalar_lea.hbm %s0, %s339
          %s341 = smul.u32 %s334, 3
          %s342 = smul.addr %s341, 4
          %s343 = scalar_lea.vmem [#allocation2], %s342
          %s344 = scalar_lea.sflag [#allocation3], %s334
          // Predicated region
          $region65: #{tpu_custom_call.1} parent=63 // pred_check
            _
          $region66: #{tpu_custom_call.1} parent=63 // pred_check_branch
            %346 = sbr.rel target = $region68
          $region67: #{tpu_custom_call.1} parent=63 // pred_region
            %347 = sst [smem:[#allocation12]] [#allocation15]
            %348 = sst [smem:[#allocation13]] [#allocation14]
          $region68: #{tpu_custom_call.1} parent=63 // pred_fallthru
            _
          %350 = shalt.err (0)
          %s352 = sshll.u32 %s340, 4
          %s353 = int_to_ptr.hbm [resolvable:$true] %s352
          %s354 = sshll.u32 %s343, 4
          %s355 = int_to_ptr.vmem [resolvable:$true] %s354
          %357 = dma.hbm_to_vmem [thread:$0]  %s353, 192, %s355, %s344
        $region64: #{tpu_custom_call.1} parent=43 // pred_fallthru
          _
        %v358 = vld [vmem:[%s322] sm:$0xf]
        %v359 = vld [vmem:[%s322 + $0x4] sm:$0xf]
        %v360 = vld [vmem:[%s322 + $0x8] sm:$0x1]
        %v361 = vld [vmem:[%s322 + $0x8] sm:$0x3]
        %v362 = vld [vmem:[%s322] sm:$0xe]
        %v366 = vunpack.c.l.b16 %v358
        %v367 = vunpack.c.l.b16 %v359
        %v368 = vunpack.c.l.b16 %v360
        %v369 = vpack.c.b16 %v367, %v366
        %v370 = vpack.c.b16 %v368, %v368
        %v374 = vunpack.c.l.b16 %v361
        %v375 = vpack.c.b16 %v374, %v374
        %vm376 = vsmask.f32 7424
        %v378 = vshrl.u32 %v369, 16
        %v380 = vshll.u32 %v369, 16
        %v382 = vrot.slane %v380, 1
        %v383 = vor.u32 %v378, %v382
        %v385 = vshll.u32 %v375, 16
        %v387 = vrot.slane %v385, 1
        %v388 = vsel %vm376, %v383, %v387
        %v389 = vshrl.u32 %v375, 16
        %v391 = vor.u32 %v389, %v387
        %v395 = vunpack.c.l.b16 %v362
        %v396 = vpack.c.b16 %v367, %v395
        %vm397 = vcmask 1046528
        %v398 = vrot.slane %v396, 1
        %v399 = vrot.slane %v375, 1
        %v400 = vsel %vm397, %v398, %v399
        %v403 = vld [vmem:[#allocation4] sm:$0xf]
        %v404 = vld [vmem:[#allocation4 + $0x4] sm:$0xf]
        %v405 = vld [vmem:[#allocation4 + $0x8] sm:$0xf]
        %v406 = vld [vmem:[#allocation4 + $0xc] sm:$0xf]
        %v407 = vld [vmem:[#allocation4 + $0x10] sm:$0xf]
        %v408 = vld [vmem:[#allocation4 + $0x14] sm:$0xf]
        %v409 = vld [vmem:[#allocation4 + $0x18] sm:$0xf]
        %v410 = vld [vmem:[#allocation4 + $0x1c] sm:$0xf]
        %v411 = vld [vmem:[#allocation4 + $0x20] sm:$0xf]
        %v412 = vld [vmem:[#allocation4 + $0x24] sm:$0xf]
        %v413 = vld [vmem:[#allocation4 + $0x28] sm:$0xf]
        %v414 = vld [vmem:[#allocation4 + $0x2c] sm:$0xf]
        %v415 = vld [vmem:[#allocation4 + $0x30] sm:$0xf]
        %v416 = vld [vmem:[#allocation4 + $0x34] sm:$0xf]
        %v417 = vld [vmem:[#allocation4 + $0x38] sm:$0xf]
        %v418 = vld [vmem:[#allocation4 + $0x3c] sm:$0xf]
        %v419 = vld [vmem:[#allocation4 + $0x40] sm:$0xf]
        %v420 = vld [vmem:[#allocation4 + $0x44] sm:$0xf]
        %v421 = vld [vmem:[#allocation4 + $0x48] sm:$0xf]
        %v422 = vld [vmem:[#allocation4 + $0x4c] sm:$0xf]
        %v423 = vld [vmem:[#allocation4 + $0x50] sm:$0xf]
        %v424 = vld [vmem:[#allocation4 + $0x54] sm:$0xf]
        %v425 = vld [vmem:[#allocation4 + $0x58] sm:$0xf]
        %v426 = vld [vmem:[#allocation4 + $0x5c] sm:$0xf]
        %v427 = vld [vmem:[#allocation4 + $0x60] sm:$0xf]
        %v428 = vld [vmem:[#allocation4 + $0x64] sm:$0xf]
        %v429 = vld [vmem:[#allocation4 + $0x68] sm:$0xf]
        %v430 = vld [vmem:[#allocation4 + $0x6c] sm:$0xf]
        %v431 = vld [vmem:[#allocation4 + $0x70] sm:$0xf]
        %v432 = vld [vmem:[#allocation4 + $0x74] sm:$0xf]
        %v433 = vld [vmem:[#allocation4 + $0x78] sm:$0xf]
        %v434 = vld [vmem:[#allocation4 + $0x7c] sm:$0xf]
        %v435 = vld [vmem:[#allocation4 + $0x80] sm:$0xf]
        %v436 = vld [vmem:[#allocation4 + $0x84] sm:$0xf]
        %v437 = vld [vmem:[#allocation4 + $0x88] sm:$0xf]
        %v438 = vld [vmem:[#allocation4 + $0x8c] sm:$0xf]
        %v439 = vld [vmem:[#allocation4 + $0x90] sm:$0xf]
        %v440 = vld [vmem:[#allocation4 + $0x94] sm:$0xf]
        %v441 = vld [vmem:[#allocation4 + $0x98] sm:$0xf]
        %v442 = vld [vmem:[#allocation4 + $0x9c] sm:$0xf]
        %v443 = vld [vmem:[#allocation4 + $0xa0] sm:$0xf]
        %v444 = vld [vmem:[#allocation4 + $0xa4] sm:$0xf]
        %v445 = vld [vmem:[#allocation4 + $0xa8] sm:$0xf]
        %v446 = vld [vmem:[#allocation4 + $0xac] sm:$0xf]
        %v447 = vld [vmem:[#allocation4 + $0xb0] sm:$0xf]
        %v448 = vld [vmem:[#allocation4 + $0xb4] sm:$0xf]
        %v449 = vld [vmem:[#allocation4 + $0xb8] sm:$0xf]
        %v450 = vld [vmem:[#allocation4 + $0xbc] sm:$0xf]
        %v451 = vld [vmem:[%s2] sm:$0x1]
        %v453 = vperm.slane %v451, 0
        %v503 = vunpack.c.l.b16 %v403
        %v504 = vunpack.c.l.b16 %v404
        %v505 = vunpack.c.l.b16 %v405
        %v506 = vunpack.c.l.b16 %v406
        %v507 = vunpack.c.l.b16 %v407
        %v508 = vunpack.c.l.b16 %v408
        %v509 = vunpack.c.l.b16 %v409
        %v510 = vunpack.c.l.b16 %v410
        %v511 = vunpack.c.l.b16 %v411
        %v512 = vunpack.c.l.b16 %v412
        %v513 = vunpack.c.l.b16 %v413
        %v514 = vunpack.c.l.b16 %v414
        %v515 = vunpack.c.l.b16 %v415
        %v516 = vunpack.c.l.b16 %v416
        %v517 = vunpack.c.l.b16 %v417
        %v518 = vunpack.c.l.b16 %v418
        %v519 = vunpack.c.l.b16 %v419
        %v520 = vunpack.c.l.b16 %v420
        %v521 = vunpack.c.l.b16 %v421
        %v522 = vunpack.c.l.b16 %v422
        %v523 = vunpack.c.l.b16 %v423
        %v524 = vunpack.c.l.b16 %v424
        %v525 = vunpack.c.l.b16 %v425
        %v526 = vunpack.c.l.b16 %v426
        %v527 = vunpack.c.l.b16 %v427
        %v528 = vunpack.c.l.b16 %v428
        %v529 = vunpack.c.l.b16 %v429
        %v530 = vunpack.c.l.b16 %v430
        %v531 = vunpack.c.l.b16 %v431
        %v532 = vunpack.c.l.b16 %v432
        %v533 = vunpack.c.l.b16 %v433
        %v534 = vunpack.c.l.b16 %v434
        %v535 = vunpack.c.l.b16 %v435
        %v536 = vunpack.c.l.b16 %v436
        %v537 = vunpack.c.l.b16 %v437
        %v538 = vunpack.c.l.b16 %v438
        %v539 = vunpack.c.l.b16 %v439
        %v540 = vunpack.c.l.b16 %v440
        %v541 = vunpack.c.l.b16 %v441
        %v542 = vunpack.c.l.b16 %v442
        %v543 = vunpack.c.l.b16 %v443
        %v544 = vunpack.c.l.b16 %v444
        %v545 = vunpack.c.l.b16 %v445
        %v546 = vunpack.c.l.b16 %v446
        %v547 = vunpack.c.l.b16 %v447
        %v548 = vunpack.c.l.b16 %v448
        %v549 = vunpack.c.l.b16 %v449
        %v550 = vunpack.c.l.b16 %v450
        %v551 = vpack.c.b16 %v504, %v503
        %v552 = vpack.c.b16 %v506, %v505
        %v553 = vpack.c.b16 %v508, %v507
        %v554 = vpack.c.b16 %v510, %v509
        %v555 = vpack.c.b16 %v512, %v511
        %v556 = vpack.c.b16 %v514, %v513
        %v557 = vpack.c.b16 %v516, %v515
        %v558 = vpack.c.b16 %v518, %v517
        %v559 = vpack.c.b16 %v520, %v519
        %v560 = vpack.c.b16 %v522, %v521
        %v561 = vpack.c.b16 %v524, %v523
        %v562 = vpack.c.b16 %v526, %v525
        %v563 = vpack.c.b16 %v528, %v527
        %v564 = vpack.c.b16 %v530, %v529
        %v565 = vpack.c.b16 %v532, %v531
        %v566 = vpack.c.b16 %v534, %v533
        %v567 = vpack.c.b16 %v536, %v535
        %v568 = vpack.c.b16 %v538, %v537
        %v569 = vpack.c.b16 %v540, %v539
        %v570 = vpack.c.b16 %v542, %v541
        %v571 = vpack.c.b16 %v544, %v543
        %v572 = vpack.c.b16 %v546, %v545
        %v573 = vpack.c.b16 %v548, %v547
        %v574 = vpack.c.b16 %v550, %v549
        %599 = vmatpush.bf16.msra.mxu0 %v558
        %600 = vmatpush.bf16.msra.mxu0 %v557
        %601 = vmatpush.bf16.msra.mxu0 %v556
        %602 = vmatpush.bf16.msra.mxu0 %v555
        %603 = vmatpush.bf16.msra.mxu0 %v554
        %604 = vmatpush.bf16.msra.mxu0 %v553
        %605 = vmatpush.bf16.msra.mxu0 %v552
        %606 = vmatpush.bf16.msra.mxu0 %v551
        %607 = vmatmul.bf16.gmra.mxu0 %v369
        %v608 = vpop.f32.mrf.mxu0
        %v609 = vadd.f32 %v453, %v608
        %v610 = vpop.f32.mrf.mxu0
        %v611 = vadd.f32 %v453, %v610
        %612 = vmatmul.bf16.gmra.mxu0 %v370
        %v613 = vpop.f32.mrf.mxu0
        %v614 = vadd.f32 %v453, %v613
        %v615 = vpop.f32.mrf.mxu0
        %616 = vdwg.mxu0
        %617 = vmatpush.bf16.msra.mxu0 %v566
        %618 = vmatpush.bf16.msra.mxu0 %v565
        %619 = vmatpush.bf16.msra.mxu0 %v564
        %620 = vmatpush.bf16.msra.mxu0 %v563
        %621 = vmatpush.bf16.msra.mxu0 %v562
        %622 = vmatpush.bf16.msra.mxu0 %v561
        %623 = vmatpush.bf16.msra.mxu0 %v560
        %624 = vmatpush.bf16.msra.mxu0 %v559
        %625 = vmatmul.bf16.gmra.mxu0 %v388
        %v626 = vpop.f32.mrf.mxu0
        %v627 = vadd.f32 %v609, %v626
        %v628 = vpop.f32.mrf.mxu0
        %v629 = vadd.f32 %v611, %v628
        %630 = vmatmul.bf16.gmra.mxu0 %v391
        %v631 = vpop.f32.mrf.mxu0
        %v632 = vadd.f32 %v614, %v631
        %v633 = vpop.f32.mrf.mxu0
        %634 = vdwg.mxu0
        %635 = vmatpush.bf16.msra.mxu0 %v574
        %636 = vmatpush.bf16.msra.mxu0 %v573
        %637 = vmatpush.bf16.msra.mxu0 %v572
        %638 = vmatpush.bf16.msra.mxu0 %v571
        %639 = vmatpush.bf16.msra.mxu0 %v570
        %640 = vmatpush.bf16.msra.mxu0 %v569
        %641 = vmatpush.bf16.msra.mxu0 %v568
        %642 = vmatpush.bf16.msra.mxu0 %v567
        %643 = vmatmul.bf16.gmra.mxu0 %v400
        %v644 = vpop.f32.mrf.mxu0
        %v645 = vadd.f32 %v627, %v644
        %v646 = vpop.f32.mrf.mxu0
        %v647 = vadd.f32 %v629, %v646
        %648 = vmatmul.bf16.gmra.mxu0 %v399
        %v649 = vpop.f32.mrf.mxu0
        %v650 = vadd.f32 %v632, %v649
        %v651 = vpop.f32.mrf.mxu0
        %652 = vdwg.mxu0
        %v653 = vmax.f32 %v645, 0.0
        %v654 = vmax.f32 %v647, 0.0
        %v655 = vmax.f32 %v650, 0.0
        %s656 = ssub.s32 %s280, 1
        %v657 = vlaneseq
        %v658 = vshrl.u32 %v657, 7
        %v659 = vadd.s32 %v658, 8
        %v660 = vadd.s32 %v658, 16
        %v661 = vstv %s656
        %v662 = vadd.s32 %v661, %v658
        %v663 = vadd.s32 %v661, %v659
        %v664 = vadd.s32 %v661, %v660
        %vm665 = vcmp.ge.s32.totalorder %v662, 0
        %vm666 = vcmp.ge.s32.totalorder %v663, 0
        %vm667 = vcmp.ge.s32.totalorder %v664, 0
        %vm668 = vcmp.lt.s32.totalorder %v662, 16
        %vm669 = vcmp.lt.s32.totalorder %v663, 16
        %vm670 = vcmp.lt.s32.totalorder %v664, 16
        %vm671 = vmand %vm665, %vm668
        %vm672 = vmand %vm666, %vm669
        %vm673 = vmand %vm667, %vm670
        %v674 = vsel %vm671, 1, 0
        %v675 = vsel %vm672, 1, 0
        %v676 = vsel %vm673, 1, 0
        %vm677 = vcmp.eq.s32.totalorder %v674, 1
        %vm678 = vcmp.eq.s32.totalorder %v675, 1
        %vm679 = vcmp.eq.s32.totalorder %v676, 1
        %v680 = vsel %vm677, %v653, 0.0
        %v681 = vsel %vm678, %v654, 0.0
        %v682 = vsel %vm679, %v655, 0.0
        %v683 = vpack.c.bf16 %v680, %v680
        %v684 = vpack.c.bf16 %v681, %v681
        %v685 = vpack.c.bf16 %v682, %v682
        %v688 = vunpack.c.l.b16 %v683
        %v689 = vunpack.c.l.b16 %v684
        %v690 = vpack.c.b16 %v689, %v688
        %v693 = vunpack.c.l.b16 %v685
        %v694 = vpack.c.b16 %v693, %v693
        %v696 = vshrl.u32 %v690, 16
        %v698 = vshll.u32 %v690, 16
        %v700 = vrot.slane %v698, 1
        %v701 = vor.u32 %v696, %v700
        %v703 = vshll.u32 %v694, 16
        %v705 = vrot.slane %v703, 1
        %v706 = vsel %vm376, %v701, %v705
        %v708 = vrot.slane %v690, 1
        %v709 = vrot.slane %v694, 1
        %v710 = vsel %vm397, %v708, %v709
        %v712 = vld [vmem:[#allocation7] sm:$0xf]
        %v713 = vld [vmem:[#allocation7 + $0x4] sm:$0xf]
        %v714 = vld [vmem:[#allocation7 + $0x8] sm:$0xf]
        %v715 = vld [vmem:[#allocation7 + $0xc] sm:$0xf]
        %v716 = vld [vmem:[#allocation7 + $0x10] sm:$0xf]
        %v717 = vld [vmem:[#allocation7 + $0x14] sm:$0xf]
        %v718 = vld [vmem:[#allocation7 + $0x18] sm:$0xf]
        %v719 = vld [vmem:[#allocation7 + $0x1c] sm:$0xf]
        %v720 = vld [vmem:[#allocation7 + $0x20] sm:$0xf]
        %v721 = vld [vmem:[#allocation7 + $0x24] sm:$0xf]
        %v722 = vld [vmem:[#allocation7 + $0x28] sm:$0xf]
        %v723 = vld [vmem:[#allocation7 + $0x2c] sm:$0xf]
        %v724 = vld [vmem:[#allocation7 + $0x30] sm:$0xf]
        %v725 = vld [vmem:[#allocation7 + $0x34] sm:$0xf]
        %v726 = vld [vmem:[#allocation7 + $0x38] sm:$0xf]
        %v727 = vld [vmem:[#allocation7 + $0x3c] sm:$0xf]
        %v728 = vld [vmem:[#allocation7 + $0x40] sm:$0xf]
        %v729 = vld [vmem:[#allocation7 + $0x44] sm:$0xf]
        %v730 = vld [vmem:[#allocation7 + $0x48] sm:$0xf]
        %v731 = vld [vmem:[#allocation7 + $0x4c] sm:$0xf]
        %v732 = vld [vmem:[#allocation7 + $0x50] sm:$0xf]
        %v733 = vld [vmem:[#allocation7 + $0x54] sm:$0xf]
        %v734 = vld [vmem:[#allocation7 + $0x58] sm:$0xf]
        %v735 = vld [vmem:[#allocation7 + $0x5c] sm:$0xf]
        %v736 = vld [vmem:[#allocation7 + $0x60] sm:$0xf]
        %v737 = vld [vmem:[#allocation7 + $0x64] sm:$0xf]
        %v738 = vld [vmem:[#allocation7 + $0x68] sm:$0xf]
        %v739 = vld [vmem:[#allocation7 + $0x6c] sm:$0xf]
        %v740 = vld [vmem:[#allocation7 + $0x70] sm:$0xf]
        %v741 = vld [vmem:[#allocation7 + $0x74] sm:$0xf]
        %v742 = vld [vmem:[#allocation7 + $0x78] sm:$0xf]
        %v743 = vld [vmem:[#allocation7 + $0x7c] sm:$0xf]
        %v744 = vld [vmem:[#allocation7 + $0x80] sm:$0xf]
        %v745 = vld [vmem:[#allocation7 + $0x84] sm:$0xf]
        %v746 = vld [vmem:[#allocation7 + $0x88] sm:$0xf]
        %v747 = vld [vmem:[#allocation7 + $0x8c] sm:$0xf]
        %v748 = vld [vmem:[#allocation7 + $0x90] sm:$0xf]
        %v749 = vld [vmem:[#allocation7 + $0x94] sm:$0xf]
        %v750 = vld [vmem:[#allocation7 + $0x98] sm:$0xf]
        %v751 = vld [vmem:[#allocation7 + $0x9c] sm:$0xf]
        %v752 = vld [vmem:[#allocation7 + $0xa0] sm:$0xf]
        %v753 = vld [vmem:[#allocation7 + $0xa4] sm:$0xf]
        %v754 = vld [vmem:[#allocation7 + $0xa8] sm:$0xf]
        %v755 = vld [vmem:[#allocation7 + $0xac] sm:$0xf]
        %v756 = vld [vmem:[#allocation7 + $0xb0] sm:$0xf]
        %v757 = vld [vmem:[#allocation7 + $0xb4] sm:$0xf]
        %v758 = vld [vmem:[#allocation7 + $0xb8] sm:$0xf]
        %v759 = vld [vmem:[#allocation7 + $0xbc] sm:$0xf]
        %v760 = vld [vmem:[%s4] sm:$0x1]
        %v762 = vperm.slane %v760, 0
        %v812 = vunpack.c.l.b16 %v712
        %v813 = vunpack.c.l.b16 %v713
        %v814 = vunpack.c.l.b16 %v714
        %v815 = vunpack.c.l.b16 %v715
        %v816 = vunpack.c.l.b16 %v716
        %v817 = vunpack.c.l.b16 %v717
        %v818 = vunpack.c.l.b16 %v718
        %v819 = vunpack.c.l.b16 %v719
        %v820 = vunpack.c.l.b16 %v720
        %v821 = vunpack.c.l.b16 %v721
        %v822 = vunpack.c.l.b16 %v722
        %v823 = vunpack.c.l.b16 %v723
        %v824 = vunpack.c.l.b16 %v724
        %v825 = vunpack.c.l.b16 %v725
        %v826 = vunpack.c.l.b16 %v726
        %v827 = vunpack.c.l.b16 %v727
        %v828 = vunpack.c.l.b16 %v728
        %v829 = vunpack.c.l.b16 %v729
        %v830 = vunpack.c.l.b16 %v730
        %v831 = vunpack.c.l.b16 %v731
        %v832 = vunpack.c.l.b16 %v732
        %v833 = vunpack.c.l.b16 %v733
        %v834 = vunpack.c.l.b16 %v734
        %v835 = vunpack.c.l.b16 %v735
        %v836 = vunpack.c.l.b16 %v736
        %v837 = vunpack.c.l.b16 %v737
        %v838 = vunpack.c.l.b16 %v738
        %v839 = vunpack.c.l.b16 %v739
        %v840 = vunpack.c.l.b16 %v740
        %v841 = vunpack.c.l.b16 %v741
        %v842 = vunpack.c.l.b16 %v742
        %v843 = vunpack.c.l.b16 %v743
        %v844 = vunpack.c.l.b16 %v744
        %v845 = vunpack.c.l.b16 %v745
        %v846 = vunpack.c.l.b16 %v746
        %v847 = vunpack.c.l.b16 %v747
        %v848 = vunpack.c.l.b16 %v748
        %v849 = vunpack.c.l.b16 %v749
        %v850 = vunpack.c.l.b16 %v750
        %v851 = vunpack.c.l.b16 %v751
        %v852 = vunpack.c.l.b16 %v752
        %v853 = vunpack.c.l.b16 %v753
        %v854 = vunpack.c.l.b16 %v754
        %v855 = vunpack.c.l.b16 %v755
        %v856 = vunpack.c.l.b16 %v756
        %v857 = vunpack.c.l.b16 %v757
        %v858 = vunpack.c.l.b16 %v758
        %v859 = vunpack.c.l.b16 %v759
        %v860 = vpack.c.b16 %v813, %v812
        %v861 = vpack.c.b16 %v815, %v814
        %v862 = vpack.c.b16 %v817, %v816
        %v863 = vpack.c.b16 %v819, %v818
        %v864 = vpack.c.b16 %v821, %v820
        %v865 = vpack.c.b16 %v823, %v822
        %v866 = vpack.c.b16 %v825, %v824
        %v867 = vpack.c.b16 %v827, %v826
        %v868 = vpack.c.b16 %v829, %v828
        %v869 = vpack.c.b16 %v831, %v830
        %v870 = vpack.c.b16 %v833, %v832
        %v871 = vpack.c.b16 %v835, %v834
        %v872 = vpack.c.b16 %v837, %v836
        %v873 = vpack.c.b16 %v839, %v838
        %v874 = vpack.c.b16 %v841, %v840
        %v875 = vpack.c.b16 %v843, %v842
        %v876 = vpack.c.b16 %v845, %v844
        %v877 = vpack.c.b16 %v847, %v846
        %v878 = vpack.c.b16 %v849, %v848
        %v879 = vpack.c.b16 %v851, %v850
        %v880 = vpack.c.b16 %v853, %v852
        %v881 = vpack.c.b16 %v855, %v854
        %v882 = vpack.c.b16 %v857, %v856
        %v883 = vpack.c.b16 %v859, %v858
        %908 = vmatpush.bf16.msra.mxu0 %v867
        %909 = vmatpush.bf16.msra.mxu0 %v866
        %910 = vmatpush.bf16.msra.mxu0 %v865
        %911 = vmatpush.bf16.msra.mxu0 %v864
        %912 = vmatpush.bf16.msra.mxu0 %v863
        %913 = vmatpush.bf16.msra.mxu0 %v862
        %914 = vmatpush.bf16.msra.mxu0 %v861
        %915 = vmatpush.bf16.msra.mxu0 %v860
        %916 = vmatmul.bf16.gmra.mxu0 %v690
        %v917 = vpop.f32.mrf.mxu0
        %v918 = vadd.f32 %v762, %v917
        %v919 = vpop.f32.mrf.mxu0
        %v920 = vadd.f32 %v762, %v919
        %921 = vdwg.mxu0
        %922 = vmatpush.bf16.msra.mxu0 %v875
        %923 = vmatpush.bf16.msra.mxu0 %v874
        %924 = vmatpush.bf16.msra.mxu0 %v873
        %925 = vmatpush.bf16.msra.mxu0 %v872
        %926 = vmatpush.bf16.msra.mxu0 %v871
        %927 = vmatpush.bf16.msra.mxu0 %v870
        %928 = vmatpush.bf16.msra.mxu0 %v869
        %929 = vmatpush.bf16.msra.mxu0 %v868
        %930 = vmatmul.bf16.gmra.mxu0 %v706
        %v931 = vpop.f32.mrf.mxu0
        %v932 = vadd.f32 %v918, %v931
        %v933 = vpop.f32.mrf.mxu0
        %v934 = vadd.f32 %v920, %v933
        %935 = vdwg.mxu0
        %936 = vmatpush.bf16.msra.mxu0 %v883
        %937 = vmatpush.bf16.msra.mxu0 %v882
        %938 = vmatpush.bf16.msra.mxu0 %v881
        %939 = vmatpush.bf16.msra.mxu0 %v880
        %940 = vmatpush.bf16.msra.mxu0 %v879
        %941 = vmatpush.bf16.msra.mxu0 %v878
        %942 = vmatpush.bf16.msra.mxu0 %v877
        %943 = vmatpush.bf16.msra.mxu0 %v876
        %944 = vmatmul.bf16.gmra.mxu0 %v710
        %v945 = vpop.f32.mrf.mxu0
        %v946 = vadd.f32 %v932, %v945
        %v947 = vpop.f32.mrf.mxu0
        %v948 = vadd.f32 %v934, %v947
        %949 = vdwg.mxu0
        %950 = vadd.xlane.f32.xlu0 %v946
        %v951 = vpop.xlane.xlu0 %950
        %952 = vadd.xlane.f32.xlu0 %v948
        %v953 = vpop.xlane.xlu0 %952
        %v954 = vmul.f32 %v946, %v946
        %v955 = vmul.f32 %v948, %v948
        %956 = vadd.xlane.f32.xlu0 %v954
        %v957 = vpop.xlane.xlu0 %956
        %958 = vadd.xlane.f32.xlu0 %v955
        %v959 = vpop.xlane.xlu0 %958
        %v960 = vmul.f32 %v951, 0.03125
        %v961 = vmul.f32 %v953, 0.03125
        %v962 = vmul.f32 %v957, 0.03125
        %v963 = vmul.f32 %v959, 0.03125
        %v964 = vmul.f32 %v960, %v960
        %v965 = vmul.f32 %v961, %v961
        %v966 = vsub.f32 %v962, %v964
        %v967 = vsub.f32 %v963, %v965
        %v968 = vmax.f32 %v966, 0.0
        %v969 = vmax.f32 %v967, 0.0
        %v970 = vsub.f32 %v946, %v960
        %v971 = vsub.f32 %v948, %v961
        %v972 = vadd.f32 %v968, 1e-05
        %v973 = vadd.f32 %v969, 1e-05
        %v974 = vrsqrt.pop %v972
        %v975 = vmul.f32 %v974, %v972
        %v976 = vmul.f32 %v975, %v974
        %v977 = vmul.f32 0.5, %v976
        %v978 = vsub.f32 1.5, %v977
        %v979 = vmul.f32 %v974, %v978
        %vm980 = vweird.f32 %v972
        %vm981 = vweird.f32 %v974
        %vm982 = vmor %vm980, %vm981
        %v983 = vsel %vm982, %v974, %v979
        %v984 = vrsqrt.pop %v973
        %v985 = vmul.f32 %v984, %v973
        %v986 = vmul.f32 %v985, %v984
        %v987 = vmul.f32 0.5, %v986
        %v988 = vsub.f32 1.5, %v987
        %v989 = vmul.f32 %v984, %v988
        %vm990 = vweird.f32 %v973
        %vm991 = vweird.f32 %v984
        %vm992 = vmor %vm990, %vm991
        %v993 = vsel %vm992, %v984, %v989
        %v994 = vmul.f32 %v970, %v983
        %v995 = vmul.f32 %v971, %v993
        %v996 = vld [vmem:[%s5] sm:$0x1]
        %v998 = vperm.slane %v996, 0
        %v1000 = vmul.f32 %v994, %v998
        %v1001 = vmul.f32 %v995, %v998
        %v1002 = vld [vmem:[%s6] sm:$0x1]
        %v1004 = vperm.slane %v1002, 0
        %v1006 = vadd.f32 %v1000, %v1004
        %v1007 = vadd.f32 %v1001, %v1004
        %v1008 = vpack.c.bf16 %v1006, %v1006
        %v1009 = vpack.c.bf16 %v1007, %v1007
        %1010 = vst [vmem:[%s278] sm:$0xf] %v1008
        %1011 = vst [vmem:[%s278 + $0x4] sm:$0xf] %v1009
        %s1012 = sand.u32 %s171, 1
        %s1013 = scalar_lea.sflag [#allocation6], %s1012
        %s1014 = sand.u32 %s171, 1
        %s1015 = smul.addr %s1014, 8
        %s1016 = scalar_lea.vmem [#allocation9], %s1015
        // Predicated region
        $region69: #{tpu_custom_call.1} parent=43 // pred_check
          %p1017 = pneg %p181
        $region70: #{tpu_custom_call.1} parent=43 // pred_check_branch
          %1019 = sbr.rel (%p1017) target = $region72
        $region71: #{tpu_custom_call.1} parent=43 // pred_region
          %s1020 = smul.u32 2, %s28
          %1022 = vsyncadd %s1013, 0
          %s1023 = smul.addr %s27, 2
          %s1024 = sadd.s32 %s1020, %s1023
          %s1025 = smul.addr %s1024, 4
          %s1026 = scalar_lea.hbm %s7, %s1025
          %s1027 = sshll.u32 %s1016, 4
          %s1028 = int_to_ptr.vmem [resolvable:$true] %s1027
          %s1029 = sshll.u32 %s1026, 4
          %s1030 = int_to_ptr.hbm [resolvable:$true] %s1029
          %1035 = dma.vmem_to_hbm [thread:$0]  %s1028, 128, %s1030, %s1013, 64, 64, 4
        $region72: #{tpu_custom_call.1} parent=43 // pred_fallthru
          _
      $region44: #{tpu_custom_call.1} parent=5 // pred_fallthru
        _
      %p1036 = scmp.le.s32.totalorder 2, %s18
      // Predicated region
      $region73: #{tpu_custom_call.1} parent=5 // pred_check
        %p1037 = pneg %p1036
      $region74: #{tpu_custom_call.1} parent=5 // pred_check_branch
        %1039 = sbr.rel (%p1037) target = $region76
      $region75: #{tpu_custom_call.1} parent=5 // pred_region
        %s1040 = ssub.s32 %s18, 2
        // Predicated region
        $region77: #{tpu_custom_call.1} parent=75 // pred_check
          %p1041 = pneg %p187
        $region78: #{tpu_custom_call.1} parent=75 // pred_check_branch
          %1043 = sbr.rel (%p1041) target = $region80
        $region79: #{tpu_custom_call.1} parent=75 // pred_region
          %s1044 = sand.u32 %s172, 1
          %s1045 = scalar_lea.sflag [#allocation6], %s1044
          %s1046 = sand.u32 %s172, 1
          %s1047 = smul.addr %s1046, 8
          %s1048 = scalar_lea.vmem [#allocation9], %s1047
          %1050 = dma.done %s1045, 128
        $region80: #{tpu_custom_call.1} parent=75 // pred_fallthru
          _
      $region76: #{tpu_custom_call.1} parent=5 // pred_fallthru
        _
    $region6: #{tpu_custom_call.1} parent=1 // loop_footer
      %s22 = sadd.s32 1, %s18
    $region7: #{tpu_custom_call.1} parent=1 // loop_footer_branch
      %17 = sbr.rel target = $region3
    $region8: #{tpu_custom_call.1} parent=1 // loop_exit
      _
    %1051 = vsyncpa [#allocation5], 1
    %s1052 = scalar_lea.sflag [#allocation5], 1
    %1053 = vsyncpa %s1052, 1
    %1054 = vsyncpa [#allocation8], 1
    %1055 = vsyncpa [#allocation6], 1
    %s1056 = scalar_lea.sflag [#allocation6], 1
    %1057 = vsyncpa %s1056, 1
  %1058 = vsyncmov [#allocation3]
  %s1059 = vpop.sfrf %1058
  %p1060 = scmp.eq.s32.totalorder %s1059, 0
  %p1061 = pneg %p1060
  %1063 = shalt.err (%p1061)
  %s1064 = scalar_lea.sflag [#allocation3], 1
  %1065 = vsyncmov %s1064
  %s1066 = vpop.sfrf %1065
  %p1067 = scmp.eq.s32.totalorder %s1066, 0
  %p1068 = pneg %p1067
  %1070 = shalt.err (%p1068)

</llo_original>
